<compile_context>
chip_gen: v6e
topology: v6e:2x2x1
jax: 0.10.0
libtpu: 0.0.40
codegen_flags: <defaults>
</compile_context>

<pallas_src>
import jax
import jax.numpy as jnp
from jax.experimental import pallas as pl
from jax.experimental.pallas import tpu as pltpu

LANES = 128
P_ROWS = 16

IN_DIM = 2
H1_DIM = 4
H2_DIM = 8
OUT_DIM = 1


def _mlp_kernel(tl_ref, p_ref, o_ref):
    """Whole forward pass in one VMEM-resident kernel; VPU/XLU only, no MXU."""
    t = tl_ref[0]                                      # SMEM scalars
    l = tl_ref[1]

    # Layer 1: 2 -> 4.  Inputs are scalars -> two broadcast FMAs over lanes.
    h1 = jnp.maximum(
        t * p_ref[0:1, :] + l * p_ref[1:2, :] + p_ref[2:3, :], 0.0)  # (1,128), lanes 0..3 live

    # Layer 2: 4 -> 8.  One vreg holds W2.T (lanes 0..3), W3 (lane 4), b2 (lane 5).
    blk = p_ref[8:16, :]                               # (8, 128)
    # h1 is zero on lanes >= 4, so the W3/b2 lanes contribute 0 to the lane sum.
    h2 = jnp.maximum(
        jnp.sum(h1 * blk, axis=1, keepdims=True) + blk[:, 5:6], 0.0)  # (8, 1)

    # Layer 3: 8 -> 1.  W3 column lives on sublanes -> sublane reduce; b3 at P[3,0].
    z = jnp.sum(h2 * blk[:, 4:5], axis=0, keepdims=True)             # (1, 1)
    o_ref[...] = jax.nn.sigmoid(z + p_ref[3:4, 0:1])                 # (1, 1)


@jax.jit
def classificatore_forward(threshold, loss, packed_params):
    """Mirrors Classificatore.forward(threshold, loss) -> array of shape (1,).

    Fully jitted: input construction, the Pallas kernel and the final reshape
    all live in one XLA program.
    """
    tl = jnp.stack([threshold, loss]).astype(jnp.float32)            # (2,)
    out = pl.pallas_call(
        _mlp_kernel,
        out_shape=jax.ShapeDtypeStruct((1, 1), jnp.float32),
        grid=(),
        in_specs=[
            pl.BlockSpec(memory_space=pltpu.MemorySpace.SMEM),        # [threshold, loss]
            pl.BlockSpec(memory_space=pltpu.MemorySpace.VMEM),        # packed params
        ],
        out_specs=pl.BlockSpec(memory_space=pltpu.MemorySpace.VMEM),
    )(tl, packed_params)
    return out.reshape(1)                              # shape (1,), like the nn.Module


def init_params(key):
    """Deterministic init matching torch.nn.Linear default: U(-1/sqrt(fan_in), ...)."""
    ks = jax.random.split(key, 6)

    def linear(kw, kb, fan_in, fan_out):
        bound = 1.0 / jnp.sqrt(jnp.float32(fan_in))
        # stored directly in (in, out) orientation (== torch weight transposed)
        w = jax.random.uniform(kw, (fan_in, fan_out), jnp.float32, -bound, bound)
        b = jax.random.uniform(kb, (fan_out,), jnp.float32, -bound, bound)
        return w, b

    w1, b1 = linear(ks[0], ks[1], IN_DIM, H1_DIM)
    w2, b2 = linear(ks[2], ks[3], H1_DIM, H2_DIM)
    w3, b3 = linear(ks[4], ks[5], H2_DIM, OUT_DIM)
    return (w1, b1, w2, b2, w3, b3)


def pack_params(params):
    """One-time packing of all weights/biases into a single (16, 128) tile."""
    w1, b1, w2, b2, w3, b3 = params
    p = jnp.zeros((P_ROWS, LANES), jnp.float32)
    p = p.at[0, :H1_DIM].set(w1[0])                    # W1 threshold row
    p = p.at[1, :H1_DIM].set(w1[1])                    # W1 loss row
    p = p.at[2, :H1_DIM].set(b1)                       # b1
    p = p.at[3, 0].set(b3[0])                          # b3
    p = p.at[8:8 + H2_DIM, :H1_DIM].set(w2.T)          # W2.T : out on sublanes, in on lanes
    p = p.at[8:8 + H2_DIM, H1_DIM].set(w3[:, 0])       # W3 column (lane 4)
    p = p.at[8:8 + H2_DIM, H1_DIM + 1].set(b2)         # b2 column (lane 5)
    return p


def _reference_forward(threshold, loss, params):
    """Plain-JAX reference for a correctness check."""
    w1, b1, w2, b2, w3, b3 = params
    x = jnp.array([threshold, loss], jnp.float32)
    h = jnp.maximum(x @ w1 + b1, 0.0)
    h = jnp.maximum(h @ w2 + b2, 0.0)
    return jax.nn.sigmoid(h @ w3 + b3)


if __name__ == "__main__":
    key = jax.random.PRNGKey(0)
    params = init_params(key)
    packed = jax.block_until_ready(pack_params(params))   # padding done once, at init

    threshold = 0.37
    loss = 1.25

    out = classificatore_forward(threshold, loss, packed)
    out = jax.block_until_ready(out)

    ref = _reference_forward(threshold, loss, params)
    assert out.shape == (1,)
    assert jnp.allclose(out, ref, atol=1e-5, rtol=1e-5), (out, ref)

    print("KERNEL_OK")
</pallas_src>

<mosaic_0001>
module attributes {stable_mosaic.version = 11 : i64} {
  func.func @_mlp_kernel(%arg0: memref<2xf32, #tpu.memory_space<smem>>, %arg1: memref<16x128xf32, #tpu.memory_space<vmem>>, %arg2: memref<1x1xf32, #tpu.memory_space<vmem>>) attributes {dimension_semantics = [], scalar_prefetch = 0 : i64, scratch_operands = 0 : i64, tpu.core_type = #tpu.core_type<tc>} {
    %c0 = arith.constant 0 : index
    %0 = memref.load %arg0[%c0] : memref<2xf32, #tpu.memory_space<smem>>
    %c1 = arith.constant 1 : index
    %1 = memref.load %arg0[%c1] : memref<2xf32, #tpu.memory_space<smem>>
    %c0_0 = arith.constant 0 : index
    %c0_1 = arith.constant 0 : index
    %2 = vector.load %arg1[%c0_0, %c0_1] : memref<16x128xf32, #tpu.memory_space<vmem>>, vector<1x128xf32>
    %3 = vector.broadcast %0 : f32 to vector<1x128xf32>
    %4 = arith.mulf %3, %2 : vector<1x128xf32>
    %c1_2 = arith.constant 1 : index
    %c0_3 = arith.constant 0 : index
    %5 = vector.load %arg1[%c1_2, %c0_3] : memref<16x128xf32, #tpu.memory_space<vmem>>, vector<1x128xf32>
    %6 = vector.broadcast %1 : f32 to vector<1x128xf32>
    %7 = arith.mulf %6, %5 : vector<1x128xf32>
    %8 = arith.addf %4, %7 : vector<1x128xf32>
    %c2 = arith.constant 2 : index
    %c0_4 = arith.constant 0 : index
    %9 = vector.load %arg1[%c2, %c0_4] : memref<16x128xf32, #tpu.memory_space<vmem>>, vector<1x128xf32>
    %10 = arith.addf %8, %9 : vector<1x128xf32>
    %cst = arith.constant 0.000000e+00 : f32
    %11 = vector.broadcast %cst : f32 to vector<1x128xf32>
    %12 = arith.maximumf %10, %11 : vector<1x128xf32>
    %c8 = arith.constant 8 : index
    %c0_5 = arith.constant 0 : index
    %13 = vector.load %arg1[%c8, %c0_5] : memref<16x128xf32, #tpu.memory_space<vmem>>, vector<8x128xf32>
    %14 = vector.broadcast %12 : vector<1x128xf32> to vector<8x128xf32>
    %15 = arith.mulf %14, %13 : vector<8x128xf32>
    %cst_6 = arith.constant dense<0.000000e+00> : vector<8xf32>
    %16 = vector.multi_reduction <add>, %15, %cst_6 [1] : vector<8x128xf32> to vector<8xf32>
    %17 = vector.shape_cast %16 : vector<8xf32> to vector<8x1xf32>
    %18 = vector.extract_strided_slice %13 {offsets = [0, 5], sizes = [8, 1], strides = [1, 1]} : vector<8x128xf32> to vector<8x1xf32>
    %19 = arith.addf %17, %18 : vector<8x1xf32>
    %cst_7 = arith.constant 0.000000e+00 : f32
    %20 = vector.broadcast %cst_7 : f32 to vector<8x1xf32>
    %21 = arith.maximumf %19, %20 : vector<8x1xf32>
    %22 = vector.extract_strided_slice %13 {offsets = [0, 4], sizes = [8, 1], strides = [1, 1]} : vector<8x128xf32> to vector<8x1xf32>
    %23 = arith.mulf %21, %22 : vector<8x1xf32>
    %cst_8 = arith.constant dense<0.000000e+00> : vector<1xf32>
    %24 = vector.multi_reduction <add>, %23, %cst_8 [0] : vector<8x1xf32> to vector<1xf32>
    %25 = vector.shape_cast %24 : vector<1xf32> to vector<1x1xf32>
    %c3 = arith.constant 3 : index
    %c0_9 = arith.constant 0 : index
    %26 = vector.load %arg1[%c3, %c0_9] : memref<16x128xf32, #tpu.memory_space<vmem>>, vector<1x1xf32>
    %27 = arith.addf %25, %26 : vector<1x1xf32>
    %28 = arith.negf %27 : vector<1x1xf32>
    %29 = math.exp %28 : vector<1x1xf32>
    %cst_10 = arith.constant 1.000000e+00 : f32
    %30 = vector.broadcast %cst_10 : f32 to vector<1x1xf32>
    %31 = arith.addf %30, %29 : vector<1x1xf32>
    %32 = arith.divf %30, %31 : vector<1x1xf32>
    %c0_11 = arith.constant 0 : index
    %c0_12 = arith.constant 0 : index
    %33 = vector.load %arg2[%c0_11, %c0_12] : memref<1x1xf32, #tpu.memory_space<vmem>>, vector<1x1xf32>
    tpu.vector_store %arg2[%c0_11, %c0_12], %32 {strides = array<i32>} : memref<1x1xf32, #tpu.memory_space<vmem>>, vector<1x1xf32>,
    return
  }
}

</mosaic_0001>

<llo_original>
// kernel: classificatore_forward.1
$region0: #{classificatore_forward.1}
  #allocation0 [shape = 'u32[]', space=smem, size = 0x4, offset = 0x4, fixed_abs, tag = 'smem constant byte address 0x4 - core index']
  #allocation1 [shape = 'u32[144,128]{1,0:T(1,128)}', space=vmem, size = 0x12000, scoped, tag = 'internal scratch']
  %s0 = inlined_call_operand.vmem [shape: f32[2], index: 0, kind: input, shape index: {}]
  %s1 = inlined_call_operand.hbm [shape: f32[16,128], index: 1, kind: input, shape index: {}]
  %s2 = inlined_call_operand.hbm [shape: f32[1,1], index: 2, kind: output, shape index: {}]
  %s3 = sld [smem:[#allocation0]]
  $region26: #{classificatore_forward.1} parent=0
    _
  %s5 = ssub.s32 1, %s3
  %s6 = scalar_select 0, %s5, %s3
  $region1: #{classificatore_forward.1} parent=0
    #allocation2 [shape = 'u8[512]{0}', space=smem, size = 0x200, scoped, tag = 'input window, operand 0, single buffered']
    #allocation3 [shape = 's32[1]{0}', space=sflag, size = 0x4, scoped, tag = 'scoped memory for classificatore_forward.1']
    #allocation4 [shape = 's32[1]{0}', space=sflag, size = 0x4, scoped, tag = 'scoped memory for classificatore_forward.1']
    #allocation5 [shape = 's32[1]{0}', space=sflag, size = 0x4, scoped, tag = 'scoped memory for classificatore_forward.1']
    #allocation6 [shape = 'u8[8192]{0}', space=vmem, size = 0x2000, scoped, tag = 'input window, operand 1, single buffered']
    #allocation7 [shape = 'u8[512]{0}', space=vmem, size = 0x400, scoped, tag = 'output window, operand 0, single buffered']
    %7 = vsyncpa [#allocation5], 0
    %8 = vsyncpa [#allocation3], 0
    %9 = vsyncpa [#allocation4], 0
    // Predicated region
    $region2: #{classificatore_forward.1} parent=1 // pred_check
      _
    $region3: #{classificatore_forward.1} parent=1 // pred_check_branch
      %11 = sbr.rel (0) target = $region5
    $region4: #{classificatore_forward.1} parent=1 // pred_region
      %s13 = ssub.s32 16, 16
      %14 = vsyncadd [#allocation5], %s13
      %s16 = sshll.u32 %s0, 4
      %s17 = int_to_ptr.vmem [resolvable:$true] %s16
      %19 = dma.vmem_to_smem %s17, 16, [#allocation2], [#allocation5]
    $region5: #{classificatore_forward.1} parent=1 // pred_fallthru
      _
    // Predicated region
    $region6: #{classificatore_forward.1} parent=1 // pred_check
      _
    $region7: #{classificatore_forward.1} parent=1 // pred_check_branch
      %21 = sbr.rel (0) target = $region9
    $region8: #{classificatore_forward.1} parent=1 // pred_region
      %s23 = ssub.s32 256, 256
      %24 = vsyncadd [#allocation3], %s23
      %s25 = sshll.u32 [#allocation6], 4
      %s26 = int_to_ptr.vmem [resolvable:$true] %s25
      %31 = dma.hbm_to_vmem [thread:$0]  %s1, 256, %s26, [#allocation3], 128, 128, 8
    $region9: #{classificatore_forward.1} parent=1 // pred_fallthru
      _
    // Predicated region
    $region10: #{classificatore_forward.1} parent=1 // pred_check
      _
    $region11: #{classificatore_forward.1} parent=1 // pred_check_branch
      %33 = sbr.rel (0) target = $region13
    $region12: #{classificatore_forward.1} parent=1 // pred_region
      %34 = dma.done [#allocation5], 16
    $region13: #{classificatore_forward.1} parent=1 // pred_fallthru
      _
    // Predicated region
    $region14: #{classificatore_forward.1} parent=1 // pred_check
      _
    $region15: #{classificatore_forward.1} parent=1 // pred_check_branch
      %36 = sbr.rel (0) target = $region17
    $region16: #{classificatore_forward.1} parent=1 // pred_region
      %37 = dma.done [#allocation3], 256
    $region17: #{classificatore_forward.1} parent=1 // pred_fallthru
      _
    %38 = sfence
    %s39 = sld [smem:[#allocation2]]
    %s40 = sld [smem:[#allocation2 + $0x1]]
    %v41 = vld [vmem:[#allocation6] sm:$0x1]
    %v42 = vstv %s39
    %v43 = vmul.f32 %v42, %v41
    %v44 = vld [vmem:[#allocation6 + $0x1] sm:$0x1]
    %v45 = vstv %s40
    %v46 = vmul.f32 %v45, %v44
    %v47 = vadd.f32 %v43, %v46
    %v48 = vld [vmem:[#allocation6 + $0x2] sm:$0x1]
    %v49 = vadd.f32 %v47, %v48
    %v50 = vmax.f32 %v49, 0.0
    %v51 = vld [vmem:[#allocation6 + $0x8] sm:$0xff]
    %v52 = vlaneseq
    %v53 = vshrl.u32 %v52, 7
    %v54 = vsub.s32 0, %v53
    %v55 = vrot.slane %v50, %v54
    %v56 = vmul.f32 %v55, %v51
    %57 = vadd.xlane.f32.xlu0 %v56
    %v58 = vpop.xlane.xlu0 %57
    %v59 = vadd.f32 %v58, %v51
    %v60 = vmax.f32 %v59, 0.0
    %62 = vrot.lane.b32.xlu0 %v51, 1
    %v63 = vpop.permute.xlu0 %62
    %v65 = vmul.f32 %v60, %v63
    %vm66 = vcmask 48168
    %v67 = vsel %vm66, %v65, 0.0
    %v68 = vrot.slane %v67, 4
    %v69 = vadd.f32 %v67, %v68
    %v70 = vrot.slane %v69, 2
    %v71 = vadd.f32 %v69, %v70
    %v72 = vrot.slane %v71, 1
    %v73 = vadd.f32 %v71, %v72
    %v74 = vld [vmem:[#allocation6 + $0x3] sm:$0x1]
    %76 = vrot.lane.b32.xlu0 %v74, 5
    %v77 = vpop.permute.xlu0 %76
    %v79 = vadd.f32 %v73, %v77
    %v80 = vxor.u32 %v79, 2147483648
    %v81 = vmul.f32 %v80, 1.442695
    %v82 = vpow.pop %v81
    %v83 = vadd.f32 %v82, 1.0
    %v84 = vrcp.pop %v83
    %v85 = vmul.f32 1.0, %v84
    %87 = vrot.lane.b32.xlu0 %v85, 123
    %v88 = vpop.permute.xlu0 %87
    %vm90 = vcmask 0
    %91 = vst.msk [vmem:[#allocation7] sm:$0x1] %vm90, %v88
    // Predicated region
    $region18: #{classificatore_forward.1} parent=1 // pred_check
      _
    $region19: #{classificatore_forward.1} parent=1 // pred_check_branch
      %93 = sbr.rel (0) target = $region21
    $region20: #{classificatore_forward.1} parent=1 // pred_region
      %s95 = ssub.s32 16, 16
      %96 = vsyncadd [#allocation4], %s95
      %s98 = sshll.u32 [#allocation7], 4
      %s99 = int_to_ptr.vmem [resolvable:$true] %s98
      %101 = dma.vmem_to_hbm [thread:$0]  %s99, 16, %s2, [#allocation4]
    $region21: #{classificatore_forward.1} parent=1 // pred_fallthru
      _
    // Predicated region
    $region22: #{classificatore_forward.1} parent=1 // pred_check
      _
    $region23: #{classificatore_forward.1} parent=1 // pred_check_branch
      %103 = sbr.rel (0) target = $region25
    $region24: #{classificatore_forward.1} parent=1 // pred_region
      %104 = dma.done [#allocation4], 16
    $region25: #{classificatore_forward.1} parent=1 // pred_fallthru
      _
    %105 = vsyncpa [#allocation3], 1
    %106 = vsyncpa [#allocation4], 1
    %107 = vsyncpa [#allocation5], 1

</llo_original>
